<compile_context>
chip_gen: v5e
topology: v5e:2x2
jax: 0.10.0
libtpu: 0.0.40
codegen_flags: <defaults>
</compile_context>

<pallas_src>
import functools

import jax
import jax.numpy as jnp
from jax.experimental import pallas as pl
from jax.experimental.pallas import tpu as pltpu

IN_DIM = 144
HID_DIM = 64
OUT_DIM = 32
DEFAULT_TILE_B = 1024  # multiple of 8; sized for v5e/v7x scoped-VMEM defaults


def _round_up(x: int, m: int) -> int:
    return ((x + m - 1) // m) * m


def affine_product_kernel(e1_ref, e2_ref, w1_ref, b1_ref, w2_ref, b2_ref,
                          m_ref, out_ref):
    """Processes one batch tile; weights are VMEM-resident (constant block idx)."""
    tile_b = e1_ref.shape[0]

    # Stack e1/e2 rows so each Linear layer is a single MXU pass over
    # 2*tile_b rows with the (small, underfilling) weights loaded once.
    x = jnp.concatenate([e1_ref[...], e2_ref[...]], axis=0)              # (2T,144)

    h = jnp.dot(x, w1_ref[...], preferred_element_type=jnp.float32)
    h = jnp.maximum(h + b1_ref[...], 0.0)                                # (2T, 64)
    y = jnp.dot(h, w2_ref[...], preferred_element_type=jnp.float32)
    y = jnp.maximum(y + b2_ref[...], 0.0)                                # (2T, 32)

    p1 = y[:tile_b]                                                      # (T, 32)
    p2 = y[tile_b:]                                                      # (T, 32)

    prod = jnp.dot(p1, m_ref[...], preferred_element_type=jnp.float32)   # (T, 32)
    diff = jnp.abs(prod - p2)
    # Per-row mean over 32 features == torch.mean(..., dim=1).
    out_ref[...] = jnp.mean(diff, axis=1, keepdims=True)                 # (T, 1)


@functools.partial(jax.jit, static_argnames=("tile_b",))
def affine_product_model(e1, e2, w1, b1, w2, b2, M, *, tile_b=DEFAULT_TILE_B):
    B = e1.shape[0]
    # Tile size: multiple of 8 (sublane constraint), capped by the padded batch.
    tb = min(tile_b, _round_up(B, 8))
    num_tiles = pl.cdiv(B, tb)
    b_pad = num_tiles * tb
    if b_pad != B:
        # Rows are independent (mean is over features only), so zero-padding
        # the batch and slicing afterwards is exact.
        pad = ((0, b_pad - B), (0, 0))
        e1 = jnp.pad(e1, pad)
        e2 = jnp.pad(e2, pad)

    def batch_spec():
        return pl.BlockSpec((tb, IN_DIM), lambda i: (i, 0))

    def const_spec(shape):
        # Constant block index => fetched once, stays VMEM-resident across tiles.
        return pl.BlockSpec(shape, lambda i: (0, 0))

    out = pl.pallas_call(
        affine_product_kernel,
        out_shape=jax.ShapeDtypeStruct((b_pad, 1), jnp.float32),
        grid=(num_tiles,),
        in_specs=[
            batch_spec(),                       # e1
            batch_spec(),                       # e2
            const_spec((IN_DIM, HID_DIM)),      # w1
            const_spec((1, HID_DIM)),           # b1
            const_spec((HID_DIM, OUT_DIM)),     # w2
            const_spec((1, OUT_DIM)),           # b2
            const_spec((OUT_DIM, OUT_DIM)),     # M
        ],
        out_specs=pl.BlockSpec((tb, 1), lambda i: (i, 0)),
        compiler_params=pltpu.CompilerParams(
            # Batch tiles are independent: shard across v7x's two TensorCores.
            dimension_semantics=("parallel",),
        ),
    )(e1, e2, w1, b1, w2, b2, M)
    return out[:B, 0]  # (B,) to match torch.mean(..., dim=1)


def init_params(key):
    """Deterministic synthetic parameters (shapes from the module __init__)."""
    k1, k2, k3, k4, k5 = jax.random.split(key, 5)
    # Stored as (in, out): kernel computes x @ W (equivalent to torch x @ W.T).
    w1 = jax.random.normal(k1, (IN_DIM, HID_DIM), jnp.float32) * 0.05
    b1 = jax.random.normal(k2, (1, HID_DIM), jnp.float32) * 0.01
    w2 = jax.random.normal(k3, (HID_DIM, OUT_DIM), jnp.float32) * 0.05
    b2 = jax.random.normal(k4, (1, OUT_DIM), jnp.float32) * 0.01
    M = jax.random.normal(k5, (OUT_DIM, OUT_DIM), jnp.float32)  # nn.init.normal_
    return w1, b1, w2, b2, M


def reference(e1, e2, w1, b1, w2, b2, M):
    hi = jax.lax.Precision.HIGHEST

    def proj(x):
        h = jnp.maximum(jnp.dot(x, w1, precision=hi) + b1, 0.0)
        return jnp.maximum(jnp.dot(h, w2, precision=hi) + b2, 0.0)

    p1, p2 = proj(e1), proj(e2)
    return jnp.mean(jnp.abs(jnp.dot(p1, M, precision=hi) - p2), axis=1)


if __name__ == "__main__":
    key = jax.random.PRNGKey(0)
    kp, ke1, ke2, ke3, ke4 = jax.random.split(key, 5)
    w1, b1, w2, b2, M = init_params(kp)

    # Small case (single tile, tile == padded batch).
    B = 8
    e1 = jax.random.normal(ke1, (B, IN_DIM), jnp.float32)
    e2 = jax.random.normal(ke2, (B, IN_DIM), jnp.float32)
    out = jax.block_until_ready(affine_product_model(e1, e2, w1, b1, w2, b2, M))
    ref = reference(e1, e2, w1, b1, w2, b2, M)
    assert out.shape == (B,)
    assert jnp.allclose(out, ref, rtol=1e-5, atol=1e-5), (out, ref)

    # Multi-tile case with a ragged last tile (exercises grid + padding path).
    B2 = 300
    f1 = jax.random.normal(ke3, (B2, IN_DIM), jnp.float32)
    f2 = jax.random.normal(ke4, (B2, IN_DIM), jnp.float32)
    out2 = jax.block_until_ready(
        affine_product_model(f1, f2, w1, b1, w2, b2, M, tile_b=128))
    ref2 = reference(f1, f2, w1, b1, w2, b2, M)
    assert out2.shape == (B2,)
    assert jnp.allclose(out2, ref2, rtol=1e-5, atol=1e-5), (out2, ref2)

    print("KERNEL_OK")
</pallas_src>

<mosaic_0001>
module attributes {stable_mosaic.version = 11 : i64} {
  func.func @affine_product_kernel(%arg0: i32, %arg1: memref<8x144xf32, #tpu.memory_space<vmem>>, %arg2: memref<8x144xf32, #tpu.memory_space<vmem>>, %arg3: memref<144x64xf32, #tpu.memory_space<vmem>>, %arg4: memref<1x64xf32, #tpu.memory_space<vmem>>, %arg5: memref<64x32xf32, #tpu.memory_space<vmem>>, %arg6: memref<1x32xf32, #tpu.memory_space<vmem>>, %arg7: memref<32x32xf32, #tpu.memory_space<vmem>>, %arg8: memref<8x1xf32, #tpu.memory_space<vmem>>) attributes {dimension_semantics = [#tpu.dimension_semantics<parallel>], iteration_bounds = array<i64: 1>, scalar_prefetch = 0 : i64, scratch_operands = 0 : i64, tpu.core_type = #tpu.core_type<tc>, window_params = [{transform_indices = @transform_0, window_bounds = array<i64: 8, 144>}, {transform_indices = @transform_1, window_bounds = array<i64: 8, 144>}, {pipeline_mode = #tpu.pipeline_mode<synchronous>, transform_indices = @transform_2, window_bounds = array<i64: 144, 64>}, {pipeline_mode = #tpu.pipeline_mode<synchronous>, transform_indices = @transform_3, window_bounds = array<i64: 1, 64>}, {pipeline_mode = #tpu.pipeline_mode<synchronous>, transform_indices = @transform_4, window_bounds = array<i64: 64, 32>}, {pipeline_mode = #tpu.pipeline_mode<synchronous>, transform_indices = @transform_5, window_bounds = array<i64: 1, 32>}, {pipeline_mode = #tpu.pipeline_mode<synchronous>, transform_indices = @transform_6, window_bounds = array<i64: 32, 32>}, {transform_indices = @transform_7, window_bounds = array<i64: 8, 1>}]} {
    %c0 = arith.constant 0 : index
    %c0_0 = arith.constant 0 : index
    %0 = vector.load %arg1[%c0, %c0_0] : memref<8x144xf32, #tpu.memory_space<vmem>>, vector<8x144xf32>
    %c0_1 = arith.constant 0 : index
    %c0_2 = arith.constant 0 : index
    %1 = vector.load %arg2[%c0_1, %c0_2] : memref<8x144xf32, #tpu.memory_space<vmem>>, vector<8x144xf32>
    %2 = tpu.concatenate %0, %1 in 0 : vector<8x144xf32>, vector<8x144xf32> -> vector<16x144xf32>
    %c0_3 = arith.constant 0 : index
    %c0_4 = arith.constant 0 : index
    %3 = vector.load %arg3[%c0_3, %c0_4] : memref<144x64xf32, #tpu.memory_space<vmem>>, vector<144x64xf32>
    %cst = arith.constant dense<0.000000e+00> : vector<16x64xf32>
    %4 = tpu.matmul %2, %3, %cst {dimension_numbers = #tpu.dot_dimension_numbers<[1], [0], [0], [1], [0, 0, 1, 1], [], []>} : vector<16x144xf32>, vector<144x64xf32>, vector<16x64xf32> -> vector<16x64xf32>
    %c0_5 = arith.constant 0 : index
    %c0_6 = arith.constant 0 : index
    %5 = vector.load %arg4[%c0_5, %c0_6] : memref<1x64xf32, #tpu.memory_space<vmem>>, vector<1x64xf32>
    %6 = vector.broadcast %5 : vector<1x64xf32> to vector<16x64xf32>
    %7 = arith.addf %4, %6 : vector<16x64xf32>
    %cst_7 = arith.constant 0.000000e+00 : f32
    %8 = vector.broadcast %cst_7 : f32 to vector<16x64xf32>
    %9 = arith.maximumf %7, %8 : vector<16x64xf32>
    %c0_8 = arith.constant 0 : index
    %c0_9 = arith.constant 0 : index
    %10 = vector.load %arg5[%c0_8, %c0_9] : memref<64x32xf32, #tpu.memory_space<vmem>>, vector<64x32xf32>
    %cst_10 = arith.constant dense<0.000000e+00> : vector<16x32xf32>
    %11 = tpu.matmul %9, %10, %cst_10 {dimension_numbers = #tpu.dot_dimension_numbers<[1], [0], [0], [1], [0, 0, 1, 1], [], []>} : vector<16x64xf32>, vector<64x32xf32>, vector<16x32xf32> -> vector<16x32xf32>
    %c0_11 = arith.constant 0 : index
    %c0_12 = arith.constant 0 : index
    %12 = vector.load %arg6[%c0_11, %c0_12] : memref<1x32xf32, #tpu.memory_space<vmem>>, vector<1x32xf32>
    %13 = vector.broadcast %12 : vector<1x32xf32> to vector<16x32xf32>
    %14 = arith.addf %11, %13 : vector<16x32xf32>
    %cst_13 = arith.constant 0.000000e+00 : f32
    %15 = vector.broadcast %cst_13 : f32 to vector<16x32xf32>
    %16 = arith.maximumf %14, %15 : vector<16x32xf32>
    %17 = vector.extract_strided_slice %16 {offsets = [0, 0], sizes = [8, 32], strides = [1, 1]} : vector<16x32xf32> to vector<8x32xf32>
    %18 = vector.extract_strided_slice %16 {offsets = [8, 0], sizes = [8, 32], strides = [1, 1]} : vector<16x32xf32> to vector<8x32xf32>
    %c0_14 = arith.constant 0 : index
    %c0_15 = arith.constant 0 : index
    %19 = vector.load %arg7[%c0_14, %c0_15] : memref<32x32xf32, #tpu.memory_space<vmem>>, vector<32x32xf32>
    %cst_16 = arith.constant dense<0.000000e+00> : vector<8x32xf32>
    %20 = tpu.matmul %17, %19, %cst_16 {dimension_numbers = #tpu.dot_dimension_numbers<[1], [0], [0], [1], [0, 0, 1, 1], [], []>} : vector<8x32xf32>, vector<32x32xf32>, vector<8x32xf32> -> vector<8x32xf32>
    %21 = arith.subf %20, %18 : vector<8x32xf32>
    %22 = math.absf %21 : vector<8x32xf32>
    %cst_17 = arith.constant dense<0.000000e+00> : vector<8xf32>
    %23 = vector.multi_reduction <add>, %22, %cst_17 [1] : vector<8x32xf32> to vector<8xf32>
    %24 = vector.shape_cast %23 : vector<8xf32> to vector<8x1xf32>
    %cst_18 = arith.constant 3.200000e+01 : f32
    %25 = vector.broadcast %cst_18 : f32 to vector<8x1xf32>
    %26 = arith.divf %24, %25 : vector<8x1xf32>
    %c0_19 = arith.constant 0 : index
    %c0_20 = arith.constant 0 : index
    %27 = vector.load %arg8[%c0_19, %c0_20] : memref<8x1xf32, #tpu.memory_space<vmem>>, vector<8x1xf32>
    tpu.vector_store %arg8[%c0_19, %c0_20], %26 {strides = array<i32>} : memref<8x1xf32, #tpu.memory_space<vmem>>, vector<8x1xf32>,
    return
  }
  func.func @transform_0(%arg0: i32) -> (i32, i32) {
    %c0_i32 = arith.constant 0 : i32
    %c0_i32_0 = arith.constant 0 : i32
    return %arg0, %c0_i32 : i32, i32
  }
  func.func @transform_1(%arg0: i32) -> (i32, i32) {
    %c0_i32 = arith.constant 0 : i32
    %c0_i32_0 = arith.constant 0 : i32
    return %arg0, %c0_i32 : i32, i32
  }
  func.func @transform_2(%arg0: i32) -> (i32, i32) {
    %c0_i32 = arith.constant 0 : i32
    %c0_i32_0 = arith.constant 0 : i32
    %c0_i32_1 = arith.constant 0 : i32
    return %c0_i32, %c0_i32_0 : i32, i32
  }
  func.func @transform_3(%arg0: i32) -> (i32, i32) {
    %c0_i32 = arith.constant 0 : i32
    %c0_i32_0 = arith.constant 0 : i32
    %c0_i32_1 = arith.constant 0 : i32
    return %c0_i32, %c0_i32_0 : i32, i32
  }
  func.func @transform_4(%arg0: i32) -> (i32, i32) {
    %c0_i32 = arith.constant 0 : i32
    %c0_i32_0 = arith.constant 0 : i32
    %c0_i32_1 = arith.constant 0 : i32
    return %c0_i32, %c0_i32_0 : i32, i32
  }
  func.func @transform_5(%arg0: i32) -> (i32, i32) {
    %c0_i32 = arith.constant 0 : i32
    %c0_i32_0 = arith.constant 0 : i32
    %c0_i32_1 = arith.constant 0 : i32
    return %c0_i32, %c0_i32_0 : i32, i32
  }
  func.func @transform_6(%arg0: i32) -> (i32, i32) {
    %c0_i32 = arith.constant 0 : i32
    %c0_i32_0 = arith.constant 0 : i32
    %c0_i32_1 = arith.constant 0 : i32
    return %c0_i32, %c0_i32_0 : i32, i32
  }
  func.func @transform_7(%arg0: i32) -> (i32, i32) {
    %c0_i32 = arith.constant 0 : i32
    %c0_i32_0 = arith.constant 0 : i32
    return %arg0, %c0_i32 : i32, i32
  }
}

</mosaic_0001>

<llo_original>
// kernel: affine_product_model.1
$region0: #{affine_product_model.1}
  #allocation0 [shape = 'u32[]', space=smem, size = 0x4, offset = 0x4, fixed_abs, tag = 'smem constant byte address 0x4 - core index']
  #allocation1 [shape = 'u32[72,128]{1,0:T(1,128)}', space=vmem, size = 0x9000, scoped, tag = 'internal scratch']
  %s0 = inlined_call_operand.vmem [shape: f32[8,144], index: 0, kind: input, shape index: {}]
  %s1 = inlined_call_operand.vmem [shape: f32[8,144], index: 1, kind: input, shape index: {}]
  %s2 = inlined_call_operand.vmem [shape: f32[144,64], index: 2, kind: input, shape index: {}]
  %s3 = inlined_call_operand.vmem [shape: f32[1,64], index: 3, kind: input, shape index: {}]
  %s4 = inlined_call_operand.vmem [shape: f32[64,32], index: 4, kind: input, shape index: {}]
  %s5 = inlined_call_operand.vmem [shape: f32[1,32], index: 5, kind: input, shape index: {}]
  %s6 = inlined_call_operand.vmem [shape: f32[32,32], index: 6, kind: input, shape index: {}]
  %s7 = inlined_call_operand.vmem [shape: f32[8,1], index: 7, kind: output, shape index: {}]
  %s8 = sld [smem:[#allocation0]]
  $region38: #{affine_product_model.1} parent=0
    _
  %s10 = ssub.s32 1, %s8
  %s11 = scalar_select 0, %s10, %s8
  // Predicated region
  $region2: #{affine_product_model.1} parent=0 // pred_check
    _
  $region3: #{affine_product_model.1} parent=0 // pred_check_branch
    %13 = sbr.rel (0) target = $region5
  $region4: #{affine_product_model.1} parent=0 // pred_region
    _
  $region5: #{affine_product_model.1} parent=0 // pred_fallthru
    _
  // Predicated region
  $region6: #{affine_product_model.1} parent=0 // pred_check
    _
  $region7: #{affine_product_model.1} parent=0 // pred_check_branch
    %15 = sbr.rel (0) target = $region9
  $region8: #{affine_product_model.1} parent=0 // pred_region
    _
  $region9: #{affine_product_model.1} parent=0 // pred_fallthru
    _
  // Predicated region
  $region10: #{affine_product_model.1} parent=0 // pred_check
    _
  $region11: #{affine_product_model.1} parent=0 // pred_check_branch
    %17 = sbr.rel (0) target = $region13
  $region12: #{affine_product_model.1} parent=0 // pred_region
    _
  $region13: #{affine_product_model.1} parent=0 // pred_fallthru
    _
  // Predicated region
  $region14: #{affine_product_model.1} parent=0 // pred_check
    _
  $region15: #{affine_product_model.1} parent=0 // pred_check_branch
    %19 = sbr.rel (0) target = $region17
  $region16: #{affine_product_model.1} parent=0 // pred_region
    _
  $region17: #{affine_product_model.1} parent=0 // pred_fallthru
    _
  // Predicated region
  $region18: #{affine_product_model.1} parent=0 // pred_check
    _
  $region19: #{affine_product_model.1} parent=0 // pred_check_branch
    %21 = sbr.rel (0) target = $region21
  $region20: #{affine_product_model.1} parent=0 // pred_region
    _
  $region21: #{affine_product_model.1} parent=0 // pred_fallthru
    _
  // Predicated region
  $region22: #{affine_product_model.1} parent=0 // pred_check
    _
  $region23: #{affine_product_model.1} parent=0 // pred_check_branch
    %23 = sbr.rel (0) target = $region25
  $region24: #{affine_product_model.1} parent=0 // pred_region
    _
  $region25: #{affine_product_model.1} parent=0 // pred_fallthru
    _
  // Predicated region
  $region26: #{affine_product_model.1} parent=0 // pred_check
    _
  $region27: #{affine_product_model.1} parent=0 // pred_check_branch
    %25 = sbr.rel (0) target = $region29
  $region28: #{affine_product_model.1} parent=0 // pred_region
    _
  $region29: #{affine_product_model.1} parent=0 // pred_fallthru
    _
  %v26 = vld [vmem:[%s0] sm:$0xff]
  %v27 = vld [vmem:[%s0 + $0x8] sm:$0xff]
  %v28 = vld [vmem:[%s1] sm:$0xff]
  %v29 = vld [vmem:[%s1 + $0x8] sm:$0xff]
  %v30 = vld [vmem:[%s2] sm:$0xff]
  %v31 = vld [vmem:[%s2 + $0x8] sm:$0xff]
  %v32 = vld [vmem:[%s2 + $0x10] sm:$0xff]
  %v33 = vld [vmem:[%s2 + $0x18] sm:$0xff]
  %v34 = vld [vmem:[%s2 + $0x20] sm:$0xff]
  %v35 = vld [vmem:[%s2 + $0x28] sm:$0xff]
  %v36 = vld [vmem:[%s2 + $0x30] sm:$0xff]
  %v37 = vld [vmem:[%s2 + $0x38] sm:$0xff]
  %v38 = vld [vmem:[%s2 + $0x40] sm:$0xff]
  %v39 = vld [vmem:[%s2 + $0x48] sm:$0xff]
  %v40 = vld [vmem:[%s2 + $0x50] sm:$0xff]
  %v41 = vld [vmem:[%s2 + $0x58] sm:$0xff]
  %v42 = vld [vmem:[%s2 + $0x60] sm:$0xff]
  %v43 = vld [vmem:[%s2 + $0x68] sm:$0xff]
  %v44 = vld [vmem:[%s2 + $0x70] sm:$0xff]
  %v45 = vld [vmem:[%s2 + $0x78] sm:$0xff]
  %v46 = vld [vmem:[%s2 + $0x80] sm:$0xff]
  %v47 = vld [vmem:[%s2 + $0x88] sm:$0xff]
  %v48 = vld [vmem:[%s3] sm:$0x1]
  %v50 = vperm.slane %v48, 0
  %vm52 = vcmask 130048
  %v54 = vsel %vm52, %v27, 0
  %v57 = vsel %vm52, %v29, 0
  %59 = vmatpush.msra.mxu0 %v45
  %60 = vmatpush.msra.mxu0 %v44
  %61 = vmatpush.msra.mxu0 %v43
  %62 = vmatpush.msra.mxu0 %v42
  %63 = vmatpush.msra.mxu0 %v41
  %64 = vmatpush.msra.mxu0 %v40
  %65 = vmatpush.msra.mxu0 %v39
  %66 = vmatpush.msra.mxu0 %v38
  %67 = vmatpush.msra.mxu0 %v37
  %68 = vmatpush.msra.mxu0 %v36
  %69 = vmatpush.msra.mxu0 %v35
  %70 = vmatpush.msra.mxu0 %v34
  %71 = vmatpush.msra.mxu0 %v33
  %72 = vmatpush.msra.mxu0 %v32
  %73 = vmatpush.msra.mxu0 %v31
  %74 = vmatpush.msra.mxu0 %v30
  %75 = vmatmul.f32.gmra.mxu0 %v26
  %v76 = vpop.f32.mrf.mxu0
  %v77 = vadd.f32 %v50, %v76
  %78 = vmatmul.f32.gmra.mxu0 %v28
  %v79 = vpop.f32.mrf.mxu0
  %v80 = vadd.f32 %v50, %v79
  %81 = vdwg.mxu0
  %82 = vmatpush.msra.mxu0 0.0
  %83 = vmatpush.msra.mxu0 0.0
  %84 = vmatpush.msra.mxu0 0.0
  %85 = vmatpush.msra.mxu0 0.0
  %86 = vmatpush.msra.mxu0 0.0
  %87 = vmatpush.msra.mxu0 0.0
  %88 = vmatpush.msra.mxu0 0.0
  %89 = vmatpush.msra.mxu0 0.0
  %90 = vmatpush.msra.mxu0 0.0
  %91 = vmatpush.msra.mxu0 0.0
  %92 = vmatpush.msra.mxu0 0.0
  %93 = vmatpush.msra.mxu0 0.0
  %94 = vmatpush.msra.mxu0 0.0
  %95 = vmatpush.msra.mxu0 0.0
  %96 = vmatpush.msra.mxu0 %v47
  %97 = vmatpush.msra.mxu0 %v46
  %98 = vmatmul.f32.gmra.mxu0 %v54
  %v99 = vpop.f32.mrf.mxu0
  %v100 = vadd.f32 %v77, %v99
  %101 = vmatmul.f32.gmra.mxu0 %v57
  %v102 = vpop.f32.mrf.mxu0
  %v103 = vadd.f32 %v80, %v102
  %104 = vdwg.mxu0
  %v105 = vmax.f32 %v100, 0.0
  %v106 = vmax.f32 %v103, 0.0
  %v107 = vld [vmem:[%s4] sm:$0xff]
  %v108 = vld [vmem:[%s4 + $0x8] sm:$0xff]
  %v109 = vld [vmem:[%s4 + $0x10] sm:$0xff]
  %v110 = vld [vmem:[%s4 + $0x18] sm:$0xff]
  %v111 = vld [vmem:[%s4 + $0x20] sm:$0xff]
  %v112 = vld [vmem:[%s4 + $0x28] sm:$0xff]
  %v113 = vld [vmem:[%s4 + $0x30] sm:$0xff]
  %v114 = vld [vmem:[%s4 + $0x38] sm:$0xff]
  %v115 = vld [vmem:[%s5] sm:$0x1]
  %v117 = vperm.slane %v115, 0
  %vm119 = vcmask 523264
  %v121 = vsel %vm119, %v105, 0
  %v124 = vsel %vm119, %v106, 0
  %126 = vmatpush.msra.mxu0 0.0
  %127 = vmatpush.msra.mxu0 0.0
  %128 = vmatpush.msra.mxu0 0.0
  %129 = vmatpush.msra.mxu0 0.0
  %130 = vmatpush.msra.mxu0 0.0
  %131 = vmatpush.msra.mxu0 0.0
  %132 = vmatpush.msra.mxu0 0.0
  %133 = vmatpush.msra.mxu0 0.0
  %134 = vmatpush.msra.mxu0 %v114
  %135 = vmatpush.msra.mxu0 %v113
  %136 = vmatpush.msra.mxu0 %v112
  %137 = vmatpush.msra.mxu0 %v111
  %138 = vmatpush.msra.mxu0 %v110
  %139 = vmatpush.msra.mxu0 %v109
  %140 = vmatpush.msra.mxu0 %v108
  %141 = vmatpush.msra.mxu0 %v107
  %142 = vmatmul.f32.gmra.mxu0 %v121
  %v143 = vpop.f32.mrf.mxu0
  %v144 = vadd.f32 %v117, %v143
  %145 = vmatmul.f32.gmra.mxu0 %v124
  %v146 = vpop.f32.mrf.mxu0
  %v147 = vadd.f32 %v117, %v146
  %148 = vdwg.mxu0
  %v149 = vmax.f32 %v144, 0.0
  %v150 = vmax.f32 %v147, 0.0
  %v151 = vld [vmem:[%s6] sm:$0xff]
  %v152 = vld [vmem:[%s6 + $0x8] sm:$0xff]
  %v153 = vld [vmem:[%s6 + $0x10] sm:$0xff]
  %v154 = vld [vmem:[%s6 + $0x18] sm:$0xff]
  %vm155 = vcmask 261120
  %v157 = vsel %vm155, %v149, 0
  %159 = vmatpush.msra.mxu0 0.0
  %160 = vmatpush.msra.mxu0 0.0
  %161 = vmatpush.msra.mxu0 0.0
  %162 = vmatpush.msra.mxu0 0.0
  %163 = vmatpush.msra.mxu0 0.0
  %164 = vmatpush.msra.mxu0 0.0
  %165 = vmatpush.msra.mxu0 0.0
  %166 = vmatpush.msra.mxu0 0.0
  %167 = vmatpush.msra.mxu0 0.0
  %168 = vmatpush.msra.mxu0 0.0
  %169 = vmatpush.msra.mxu0 0.0
  %170 = vmatpush.msra.mxu0 0.0
  %171 = vmatpush.msra.mxu0 %v154
  %172 = vmatpush.msra.mxu0 %v153
  %173 = vmatpush.msra.mxu0 %v152
  %174 = vmatpush.msra.mxu0 %v151
  %175 = vmatmul.f32.gmra.mxu0 %v157
  %v176 = vpop.f32.mrf.mxu0
  %v177 = vadd.f32 0.0, %v176
  %178 = vdwg.mxu0
  %v179 = vsub.f32 %v177, %v150
  %v180 = vand.u32 2147483647, %v179
  %v181 = vsel %vm155, %v180, 0.0
  %182 = vadd.xlane.f32.xlu0 %v181
  %v183 = vpop.xlane.xlu0 %182
  %v184 = vrcp.pop 32.0
  %v185 = vmul.f32 32.0, %v184
  %v186 = vsub.f32 1.0, %v185
  %v187 = vmul.f32 %v184, %v186
  %v188 = vadd.f32 %v184, %v187
  %vm189 = vweird.f32 %v184
  %v190 = vsel %vm189, %v184, %v188
  %v191 = vmul.f32 %v183, %v190
  %vm192 = vcmask 7168
  %193 = vst.msk [vmem:[%s7] sm:$0xff] %vm192, %v191
  // Predicated region
  $region30: #{affine_product_model.1} parent=0 // pred_check
    _
  $region31: #{affine_product_model.1} parent=0 // pred_check_branch
    %195 = sbr.rel (0) target = $region33
  $region32: #{affine_product_model.1} parent=0 // pred_region
    _
  $region33: #{affine_product_model.1} parent=0 // pred_fallthru
    _
  // Predicated region
  $region34: #{affine_product_model.1} parent=0 // pred_check
    _
  $region35: #{affine_product_model.1} parent=0 // pred_check_branch
    %197 = sbr.rel (0) target = $region37
  $region36: #{affine_product_model.1} parent=0 // pred_region
    _
  $region37: #{affine_product_model.1} parent=0 // pred_fallthru
    _

</llo_original>
